<compile_context>
chip_gen: v7x
topology: tpu7x:2x2x1
jax: 0.10.0
libtpu: 0.0.40
codegen_flags: <defaults>
</compile_context>

<pallas_src>
import jax
import jax.numpy as jnp
from jax.experimental import pallas as pl
from jax.experimental.pallas import tpu as pltpu


def _lsep_kernel(y_hat_ref, y_ref, out_ref):
    yh = y_hat_ref[...].astype(jnp.float32)            # (TB, C)
    y = y_ref[...].astype(jnp.float32)                 # (TB, C)

    is_pos = (y == 1.0)                                 # matches torch.eq(y, 1)

    # Per-row shift for range control (cancels exactly in the product below).
    m = jnp.max(yh, axis=-1, keepdims=True)             # (TB, 1)

    # Single exp per element: exponent sign chosen per class.
    #   positives: exp(m - yh_i)   negatives: exp(yh_j - m)
    z = jnp.where(is_pos, m - yh, yh - m)                # (TB, C)
    e = jnp.exp(z)                                       # (TB, C), one EUP pass

    s_in = jnp.sum(jnp.where(is_pos, e, 0.0), axis=-1, keepdims=True)   # (TB, 1)
    s_out = jnp.sum(jnp.where(is_pos, 0.0, e), axis=-1, keepdims=True)  # (TB, 1)

    # Padded rows (y all zero) give s_in == 0 -> log(1 + 0) == 0 contribution.
    out_ref[...] = jnp.log(1.0 + s_in * s_out)


def lsep_loss(y_hat, y, *, block_rows=1024):
    """Pallas TPU implementation of LSEP.forward(y_hat, y). Returns a scalar."""
    B, C = y_hat.shape
    assert y.shape == (B, C)

    # Sublane-aligned batch tile, capped at ~2 MiB per input tile so
    # 2 inputs x 2 pipeline buffers (~8 MiB) stay well under the default
    # scoped-VMEM limit on every generation (v5e 16 MiB, v6e/v7x 32 MiB).
    bytes_per_row = C * max(y_hat.dtype.itemsize, y.dtype.itemsize)
    cap_rows = max(8, ((2 * 1024 * 1024) // bytes_per_row) // 8 * 8)
    tb = max(8, (min(block_rows, cap_rows, pl.cdiv(B, 8) * 8) // 8) * 8)

    Bp = pl.cdiv(B, tb) * tb
    if Bp != B:
        pad = Bp - B
        y_hat = jnp.pad(y_hat, ((0, pad), (0, 0)))
        y = jnp.pad(y, ((0, pad), (0, 0)))   # zero rows -> zero loss contribution
    num_tiles = Bp // tb

    per_row = pl.pallas_call(
        _lsep_kernel,
        out_shape=jax.ShapeDtypeStruct((Bp, 1), jnp.float32),
        grid=(num_tiles,),
        in_specs=[
            pl.BlockSpec((tb, C), lambda i: (i, 0)),
            pl.BlockSpec((tb, C), lambda i: (i, 0)),
        ],
        out_specs=pl.BlockSpec((tb, 1), lambda i: (i, 0)),
        compiler_params=pltpu.CompilerParams(
            dimension_semantics=("parallel",),
        ),
    )(y_hat, y)

    # Tiny final mean reduction in plain JAX (keeps the batch grid axis
    # 'parallel' so both v7x TensorCores can be used).
    return jnp.sum(per_row) / jnp.float32(B)


def lsep_loss_ref(y_hat, y):
    """Pure-JAX reference matching the PyTorch module exactly."""
    yf = y.astype(jnp.float32)
    y_in = (yf == 1.0)
    y_out = (yf != 1.0)
    truth = jnp.logical_and(y_in[:, :, None], y_out[:, None, :]).astype(jnp.float32)
    sub = y_hat[:, :, None] - y_hat[:, None, :]
    sparse = jnp.exp(-sub) * truth
    sums = 1.0 + jnp.sum(sparse, axis=(1, 2))
    return jnp.mean(jnp.log(sums))


if __name__ == "__main__":
    key = jax.random.PRNGKey(0)
    k1, k2 = jax.random.split(key)

    B, C = 8, 16  # small shapes: batch=8, num_labels=16
    y_hat = jax.random.normal(k1, (B, C), dtype=jnp.float32)
    # binary multi-label targets in {0, 1}, stored as float32 (like y.float())
    y = (jax.random.uniform(k2, (B, C)) > 0.5).astype(jnp.float32)

    loss = jax.block_until_ready(lsep_loss(y_hat, y))
    ref = jax.block_until_ready(lsep_loss_ref(y_hat, y))

    assert jnp.allclose(loss, ref, rtol=1e-5, atol=1e-5), (loss, ref)
    print("KERNEL_OK")
</pallas_src>

<mosaic_0001>
module attributes {stable_mosaic.version = 11 : i64} {
  func.func @_lsep_kernel(%arg0: i32, %arg1: memref<8x16xf32, #tpu.memory_space<vmem>>, %arg2: memref<8x16xf32, #tpu.memory_space<vmem>>, %arg3: memref<8x1xf32, #tpu.memory_space<vmem>>) attributes {dimension_semantics = [#tpu.dimension_semantics<parallel>], iteration_bounds = array<i64: 1>, scalar_prefetch = 0 : i64, scratch_operands = 0 : i64, tpu.core_type = #tpu.core_type<tc>, window_params = [{transform_indices = @transform_0, window_bounds = array<i64: 8, 16>}, {transform_indices = @transform_1, window_bounds = array<i64: 8, 16>}, {transform_indices = @transform_2, window_bounds = array<i64: 8, 1>}]} {
    %c0 = arith.constant 0 : index
    %c0_0 = arith.constant 0 : index
    %0 = vector.load %arg1[%c0, %c0_0] : memref<8x16xf32, #tpu.memory_space<vmem>>, vector<8x16xf32>
    %c0_1 = arith.constant 0 : index
    %c0_2 = arith.constant 0 : index
    %1 = vector.load %arg2[%c0_1, %c0_2] : memref<8x16xf32, #tpu.memory_space<vmem>>, vector<8x16xf32>
    %cst = arith.constant 1.000000e+00 : f32
    %2 = vector.broadcast %cst : f32 to vector<8x16xf32>
    %3 = arith.cmpf oeq, %1, %2 : vector<8x16xf32>
    %cst_3 = arith.constant dense<0xFF800000> : vector<8xf32>
    %4 = vector.multi_reduction <maximumf>, %0, %cst_3 [1] : vector<8x16xf32> to vector<8xf32>
    %5 = vector.shape_cast %4 : vector<8xf32> to vector<8x1xf32>
    %6 = vector.broadcast %5 : vector<8x1xf32> to vector<8x16xf32>
    %7 = arith.subf %6, %0 : vector<8x16xf32>
    %8 = vector.broadcast %5 : vector<8x1xf32> to vector<8x16xf32>
    %9 = arith.subf %0, %8 : vector<8x16xf32>
    %10 = arith.select %3, %7, %9 : vector<8x16xi1>, vector<8x16xf32>
    %11 = math.exp %10 : vector<8x16xf32>
    %cst_4 = arith.constant 0.000000e+00 : f32
    %12 = vector.broadcast %cst_4 : f32 to vector<8x16xf32>
    %13 = arith.select %3, %11, %12 : vector<8x16xi1>, vector<8x16xf32>
    %cst_5 = arith.constant dense<0.000000e+00> : vector<8xf32>
    %14 = vector.multi_reduction <add>, %13, %cst_5 [1] : vector<8x16xf32> to vector<8xf32>
    %15 = vector.shape_cast %14 : vector<8xf32> to vector<8x1xf32>
    %cst_6 = arith.constant 0.000000e+00 : f32
    %16 = vector.broadcast %cst_6 : f32 to vector<8x16xf32>
    %17 = arith.select %3, %16, %11 : vector<8x16xi1>, vector<8x16xf32>
    %cst_7 = arith.constant dense<0.000000e+00> : vector<8xf32>
    %18 = vector.multi_reduction <add>, %17, %cst_7 [1] : vector<8x16xf32> to vector<8xf32>
    %19 = vector.shape_cast %18 : vector<8xf32> to vector<8x1xf32>
    %20 = arith.mulf %15, %19 : vector<8x1xf32>
    %cst_8 = arith.constant 1.000000e+00 : f32
    %21 = vector.broadcast %cst_8 : f32 to vector<8x1xf32>
    %22 = arith.addf %21, %20 : vector<8x1xf32>
    %23 = math.log %22 : vector<8x1xf32>
    %c0_9 = arith.constant 0 : index
    %c0_10 = arith.constant 0 : index
    %24 = vector.load %arg3[%c0_9, %c0_10] : memref<8x1xf32, #tpu.memory_space<vmem>>, vector<8x1xf32>
    tpu.vector_store %arg3[%c0_9, %c0_10], %23 {strides = array<i32>} : memref<8x1xf32, #tpu.memory_space<vmem>>, vector<8x1xf32>,
    return
  }
  func.func @transform_0(%arg0: i32) -> (i32, i32) {
    %c0_i32 = arith.constant 0 : i32
    %c0_i32_0 = arith.constant 0 : i32
    return %arg0, %c0_i32 : i32, i32
  }
  func.func @transform_1(%arg0: i32) -> (i32, i32) {
    %c0_i32 = arith.constant 0 : i32
    %c0_i32_0 = arith.constant 0 : i32
    return %arg0, %c0_i32 : i32, i32
  }
  func.func @transform_2(%arg0: i32) -> (i32, i32) {
    %c0_i32 = arith.constant 0 : i32
    %c0_i32_0 = arith.constant 0 : i32
    return %arg0, %c0_i32 : i32, i32
  }
}

</mosaic_0001>

<llo_original>
// kernel: tpu_custom_call.1
$region0: #{tpu_custom_call.1}
  #allocation0 [shape = 'u32[]', space=smem, size = 0x4, offset = 0x4, fixed_abs, tag = 'smem constant byte address 0x4 - core index']
  #allocation1 [shape = 'u32[144,128]{1,0:T(1,128)}', space=vmem, size = 0x12000, scoped, tag = 'internal scratch']
  %s0 = inlined_call_operand.hbm [shape: f32[8,16], index: 0, kind: input, shape index: {}]
  %s1 = inlined_call_operand.hbm [shape: f32[8,16], index: 1, kind: input, shape index: {}]
  %s2 = inlined_call_operand.vmem [shape: f32[8,1], index: 2, kind: output, shape index: {}]
  %s3 = sld [smem:[#allocation0]]
  $region26: #{tpu_custom_call.1} parent=0
    _
  %s5 = ssub.s32 1, %s3
  %s6 = scalar_select 0, %s5, %s3
  $region1: #{tpu_custom_call.1} parent=0
    #allocation2 [shape = 'u8[4096]{0}', space=vmem, size = 0x1000, scoped, tag = 'input window, operand 0, single buffered']
    #allocation3 [shape = 's32[1]{0}', space=sflag, size = 0x4, scoped, tag = 'scoped memory for tpu_custom_call.1']
    #allocation4 [shape = 'u8[4096]{0}', space=vmem, size = 0x1000, scoped, tag = 'input window, operand 1, single buffered']
    #allocation5 [shape = 's32[1]{0}', space=sflag, size = 0x4, scoped, tag = 'scoped memory for tpu_custom_call.1']
    %7 = vsyncpa [#allocation3], 0
    %8 = vsyncpa [#allocation5], 0
    // Predicated region
    $region2: #{tpu_custom_call.1} parent=1 // pred_check
      _
    $region3: #{tpu_custom_call.1} parent=1 // pred_check_branch
      %10 = sbr.rel (0) target = $region5
    $region4: #{tpu_custom_call.1} parent=1 // pred_region
      %s12 = ssub.s32 128, 128
      %13 = vsyncadd [#allocation3], %s12
      %s15 = sshll.u32 [#allocation2], 4
      %s16 = int_to_ptr.vmem [resolvable:$true] %s15
      %18 = dma.hbm_to_vmem [thread:$0]  %s0, 128, %s16, [#allocation3]
    $region5: #{tpu_custom_call.1} parent=1 // pred_fallthru
      _
    // Predicated region
    $region6: #{tpu_custom_call.1} parent=1 // pred_check
      _
    $region7: #{tpu_custom_call.1} parent=1 // pred_check_branch
      %20 = sbr.rel (0) target = $region9
    $region8: #{tpu_custom_call.1} parent=1 // pred_region
      %s22 = ssub.s32 128, 128
      %23 = vsyncadd [#allocation5], %s22
      %s25 = sshll.u32 [#allocation4], 4
      %s26 = int_to_ptr.vmem [resolvable:$true] %s25
      %28 = dma.hbm_to_vmem [thread:$0]  %s1, 128, %s26, [#allocation5]
    $region9: #{tpu_custom_call.1} parent=1 // pred_fallthru
      _
    // Predicated region
    $region10: #{tpu_custom_call.1} parent=1 // pred_check
      _
    $region11: #{tpu_custom_call.1} parent=1 // pred_check_branch
      %30 = sbr.rel (0) target = $region13
    $region12: #{tpu_custom_call.1} parent=1 // pred_region
      %31 = dma.done [#allocation3], 128
    $region13: #{tpu_custom_call.1} parent=1 // pred_fallthru
      _
    // Predicated region
    $region14: #{tpu_custom_call.1} parent=1 // pred_check
      _
    $region15: #{tpu_custom_call.1} parent=1 // pred_check_branch
      %33 = sbr.rel (0) target = $region17
    $region16: #{tpu_custom_call.1} parent=1 // pred_region
      %34 = dma.done [#allocation5], 128
    $region17: #{tpu_custom_call.1} parent=1 // pred_fallthru
      _
    %v35 = vld [vmem:[#allocation2] sm:$0xff]
    %v36 = vld [vmem:[#allocation4] sm:$0xff]
    %vm37 = vcmp.eq.f32.partialorder %v36, 1.0
    %vm38 = vcmask 130048
    %v39 = vsel %vm38, %v35, -inf
    %40 = vmax.xlane.f32.xlu0 %v39
    %v41 = vpop.xlane.xlu0 %40
    %v42 = vsub.f32 %v41, %v35
    %v43 = vsub.f32 %v35, %v41
    %v44 = vsel %vm37, %v42, %v43
    %v45 = vmul.f32 %v44, 1.442695
    %v46 = vpow.pop %v45
    %v47 = vsel %vm37, %v46, 0.0
    %v48 = vsel %vm38, %v47, 0.0
    %49 = vadd.xlane.f32.xlu0 %v48
    %v50 = vpop.xlane.xlu0 %49
    %v51 = vsel %vm37, 0.0, %v46
    %v52 = vsel %vm38, %v51, 0.0
    %53 = vadd.xlane.f32.xlu0 %v52
    %v54 = vpop.xlane.xlu0 %53
    %v55 = vmul.f32 %v50, %v54
    %v56 = vadd.f32 %v55, 1.0
    %v57 = vlog2.pop %v56
    %v58 = vmul.f32 %v57, 0.6931472
    %vm59 = vcmask 7168
    %60 = vst.msk [vmem:[%s2] sm:$0xff] %vm59, %v58
    // Predicated region
    $region18: #{tpu_custom_call.1} parent=1 // pred_check
      _
    $region19: #{tpu_custom_call.1} parent=1 // pred_check_branch
      %62 = sbr.rel (0) target = $region21
    $region20: #{tpu_custom_call.1} parent=1 // pred_region
      _
    $region21: #{tpu_custom_call.1} parent=1 // pred_fallthru
      _
    // Predicated region
    $region22: #{tpu_custom_call.1} parent=1 // pred_check
      _
    $region23: #{tpu_custom_call.1} parent=1 // pred_check_branch
      %64 = sbr.rel (0) target = $region25
    $region24: #{tpu_custom_call.1} parent=1 // pred_region
      _
    $region25: #{tpu_custom_call.1} parent=1 // pred_fallthru
      _
    %65 = vsyncpa [#allocation3], 1
    %66 = vsyncpa [#allocation5], 1

</llo_original>
